<compile_context>
chip_gen: v5e
topology: v5e:2x2
jax: 0.10.0
libtpu: 0.0.40
codegen_flags: <defaults>
</compile_context>

<pallas_src>
import functools

import jax
import jax.numpy as jnp
from jax.experimental import pallas as pl
from jax.experimental.pallas import tpu as pltpu

LEAKY_SLOPE = 0.2


def _gcn_forward_kernel(num_layers, tb, n_nodes, x_ref, a_ref, *refs):
    """Fused GCN forward for one block of `tb` batch elements.

    x_ref : VMEM (tb, N, F_in)     current batch block
    a_ref : VMEM (N, N)            adjacency (VMEM-resident across grid)
    refs  : (w0, b0, w1, b1, ..., out_ref)
            w_i : VMEM (F_i, F_{i+1})   (already transposed: h @ w_i)
            b_i : VMEM (1, F_{i+1})
    """
    out_ref = refs[-1]
    wb = refs[:-1]

    adj = a_ref[...].astype(jnp.float32)                          # (N, N)
    # Collapse leading dims: (tb, N, F_in) -> (tb*N, F_in). Layout-free when
    # N is sublane-aligned; lets the Linear run as one big MXU matmul.
    h = x_ref[...].astype(jnp.float32).reshape(tb * n_nodes, -1)

    for i in range(num_layers):
        w = wb[2 * i][...].astype(jnp.float32)                    # (F_i, F_{i+1})
        b = wb[2 * i + 1][...].astype(jnp.float32)                # (1, F_{i+1})

        # support = Linear(h) = h @ W^T + b, over ALL tb*N rows at once (MXU).
        support = jnp.dot(h, w, preferred_element_type=jnp.float32) + b

        # output = A @ support, per batch element (shared A), statically
        # unrolled; static row slices are aligned (N multiple of 8) and free.
        outs = []
        for bidx in range(tb):
            s_b = support[bidx * n_nodes:(bidx + 1) * n_nodes, :]
            outs.append(jnp.dot(adj, s_b, preferred_element_type=jnp.float32))
        h = jnp.concatenate(outs, axis=0) if tb > 1 else outs[0]  # (tb*N, F)

        if i < num_layers - 1:
            # LeakyReLU(0.2) on the VPU.
            h = jnp.where(h > 0, h, LEAKY_SLOPE * h)

    # TODO(synk): training-mode F.dropout before the last layer is not
    # implemented; eval-mode (identity) semantics are used here.
    out_ref[...] = h.reshape(tb, n_nodes, -1).astype(out_ref.dtype)


def gcn_forward(x, adj, weights, biases, *, batch_block=None):
    """Pallas equivalent of GCN.forward (eval mode).

    x       : (B, N, F_in)
    adj     : (N, N)
    weights : list of (F_i, F_{i+1}) arrays  (transposed nn.Linear weights)
    biases  : list of (1, F_{i+1}) arrays
    """
    B, N, f_in = x.shape
    num_layers = len(weights)
    f_out = weights[-1].shape[1]

    if batch_block is None:
        # Aim for >= ~128 rows in the flattened Linear matmul, capped by B.
        batch_block = max(1, min(B, -(-128 // N)))
    tb = batch_block

    # Pad batch to a multiple of the batch block (sliced off at the end).
    pad = (-B) % tb
    if pad:
        x = jnp.concatenate([x, jnp.zeros((pad, N, f_in), x.dtype)], axis=0)
    bp = B + pad

    in_specs = [
        pl.BlockSpec((tb, N, f_in), lambda b: (b, 0, 0)),  # per-block x tile
        pl.BlockSpec((N, N), lambda b: (0, 0)),            # resident adjacency
    ]
    inputs = [x, adj]
    for w, bias in zip(weights, biases):
        in_specs.append(pl.BlockSpec(w.shape, lambda b: (0, 0)))    # resident
        in_specs.append(pl.BlockSpec(bias.shape, lambda b: (0, 0)))  # resident
        inputs.append(w)
        inputs.append(bias)

    kernel = functools.partial(_gcn_forward_kernel, num_layers, tb, N)

    out = pl.pallas_call(
        kernel,
        out_shape=jax.ShapeDtypeStruct((bp, N, f_out), x.dtype),
        grid_spec=pltpu.PrefetchScalarGridSpec(
            num_scalar_prefetch=0,
            grid=(bp // tb,),
            in_specs=in_specs,
            out_specs=pl.BlockSpec((tb, N, f_out), lambda b: (b, 0, 0)),
        ),
        compiler_params=pltpu.CompilerParams(
            dimension_semantics=("parallel",),   # batch blocks are independent
        ),
    )(*inputs)

    return out[:B] if pad else out


def gcn_reference(x, adj, weights, biases):
    """Pure-JAX reference with identical semantics (eval mode)."""
    h = x
    num_layers = len(weights)
    for i in range(num_layers):
        support = h @ weights[i] + biases[i]                 # Linear
        h = jnp.einsum("nm,bmf->bnf", adj, support)          # A @ support
        if i < num_layers - 1:
            h = jnp.where(h > 0, h, LEAKY_SLOPE * h)         # LeakyReLU(0.2)
    return h


if __name__ == "__main__":
    # Small, module-consistent shapes.
    batch = 2
    n_nodes = 16
    ninput = 32
    nhid = [64]
    noutput = 16
    channels = [ninput] + nhid + [noutput]

    key = jax.random.PRNGKey(0)
    k_x, k_a, k_w = jax.random.split(key, 3)

    # Input features and a row-normalized adjacency matrix.
    x = jax.random.normal(k_x, (batch, n_nodes, ninput), dtype=jnp.float32)
    a_raw = jax.random.uniform(k_a, (n_nodes, n_nodes), dtype=jnp.float32)
    a_raw = a_raw + jnp.eye(n_nodes, dtype=jnp.float32)
    adj = a_raw / jnp.sum(a_raw, axis=1, keepdims=True)

    # Deterministic parameter init mimicking the module:
    #   weight ~ U(-1/sqrt(out_features), 1/sqrt(out_features))  (reset_parameters)
    #   bias   ~ U(-1/sqrt(in_features),  1/sqrt(in_features))   (nn.Linear default)
    weights, biases = [], []
    for i in range(len(channels) - 1):
        f_in, f_out = channels[i], channels[i + 1]
        k_w, kw_i, kb_i = jax.random.split(k_w, 3)
        w_std = 1.0 / (f_out ** 0.5)
        b_std = 1.0 / (f_in ** 0.5)
        # Stored pre-transposed: (f_in, f_out) so the kernel does h @ w.
        w = jax.random.uniform(kw_i, (f_in, f_out), dtype=jnp.float32,
                               minval=-w_std, maxval=w_std)
        b = jax.random.uniform(kb_i, (1, f_out), dtype=jnp.float32,
                               minval=-b_std, maxval=b_std)
        weights.append(w)
        biases.append(b)

    out = gcn_forward(x, adj, weights, biases)
    out = jax.block_until_ready(out)

    ref = gcn_reference(x, adj, weights, biases)
    assert out.shape == (batch, n_nodes, noutput)
    assert jnp.allclose(out, ref, atol=1e-4, rtol=1e-4), \
        "mismatch vs pure-JAX GCN reference"

    print("KERNEL_OK")
</pallas_src>

<mosaic_0001>
module attributes {stable_mosaic.version = 11 : i64} {
  func.func @_gcn_forward_kernel(%arg0: i32, %arg1: memref<2x16x32xf32, #tpu.memory_space<vmem>>, %arg2: memref<16x16xf32, #tpu.memory_space<vmem>>, %arg3: memref<32x64xf32, #tpu.memory_space<vmem>>, %arg4: memref<1x64xf32, #tpu.memory_space<vmem>>, %arg5: memref<64x16xf32, #tpu.memory_space<vmem>>, %arg6: memref<1x16xf32, #tpu.memory_space<vmem>>, %arg7: memref<2x16x16xf32, #tpu.memory_space<vmem>>) attributes {dimension_semantics = [#tpu.dimension_semantics<parallel>], iteration_bounds = array<i64: 1>, scalar_prefetch = 0 : i64, scratch_operands = 0 : i64, tpu.core_type = #tpu.core_type<tc>, window_params = [{transform_indices = @transform_0, window_bounds = array<i64: 2, 16, 32>}, {pipeline_mode = #tpu.pipeline_mode<synchronous>, transform_indices = @transform_1, window_bounds = array<i64: 16, 16>}, {pipeline_mode = #tpu.pipeline_mode<synchronous>, transform_indices = @transform_2, window_bounds = array<i64: 32, 64>}, {pipeline_mode = #tpu.pipeline_mode<synchronous>, transform_indices = @transform_3, window_bounds = array<i64: 1, 64>}, {pipeline_mode = #tpu.pipeline_mode<synchronous>, transform_indices = @transform_4, window_bounds = array<i64: 64, 16>}, {pipeline_mode = #tpu.pipeline_mode<synchronous>, transform_indices = @transform_5, window_bounds = array<i64: 1, 16>}, {transform_indices = @transform_6, window_bounds = array<i64: 2, 16, 16>}]} {
    %c0 = arith.constant 0 : index
    %c0_0 = arith.constant 0 : index
    %0 = vector.load %arg2[%c0, %c0_0] : memref<16x16xf32, #tpu.memory_space<vmem>>, vector<16x16xf32>
    %c0_1 = arith.constant 0 : index
    %c0_2 = arith.constant 0 : index
    %c0_3 = arith.constant 0 : index
    %1 = vector.load %arg1[%c0_1, %c0_2, %c0_3] : memref<2x16x32xf32, #tpu.memory_space<vmem>>, vector<2x16x32xf32>
    %2 = vector.shape_cast %1 : vector<2x16x32xf32> to vector<32x32xf32>
    %c0_4 = arith.constant 0 : index
    %c0_5 = arith.constant 0 : index
    %3 = vector.load %arg3[%c0_4, %c0_5] : memref<32x64xf32, #tpu.memory_space<vmem>>, vector<32x64xf32>
    %c0_6 = arith.constant 0 : index
    %c0_7 = arith.constant 0 : index
    %4 = vector.load %arg4[%c0_6, %c0_7] : memref<1x64xf32, #tpu.memory_space<vmem>>, vector<1x64xf32>
    %cst = arith.constant dense<0.000000e+00> : vector<32x64xf32>
    %5 = tpu.matmul %2, %3, %cst {dimension_numbers = #tpu.dot_dimension_numbers<[1], [0], [0], [1], [0, 0, 1, 1], [], []>} : vector<32x32xf32>, vector<32x64xf32>, vector<32x64xf32> -> vector<32x64xf32>
    %6 = vector.broadcast %4 : vector<1x64xf32> to vector<32x64xf32>
    %7 = arith.addf %5, %6 : vector<32x64xf32>
    %8 = vector.extract_strided_slice %7 {offsets = [0, 0], sizes = [16, 64], strides = [1, 1]} : vector<32x64xf32> to vector<16x64xf32>
    %cst_8 = arith.constant dense<0.000000e+00> : vector<16x64xf32>
    %9 = tpu.matmul %0, %8, %cst_8 {dimension_numbers = #tpu.dot_dimension_numbers<[1], [0], [0], [1], [0, 0, 1, 1], [], []>} : vector<16x16xf32>, vector<16x64xf32>, vector<16x64xf32> -> vector<16x64xf32>
    %10 = vector.extract_strided_slice %7 {offsets = [16, 0], sizes = [16, 64], strides = [1, 1]} : vector<32x64xf32> to vector<16x64xf32>
    %cst_9 = arith.constant dense<0.000000e+00> : vector<16x64xf32>
    %11 = tpu.matmul %0, %10, %cst_9 {dimension_numbers = #tpu.dot_dimension_numbers<[1], [0], [0], [1], [0, 0, 1, 1], [], []>} : vector<16x16xf32>, vector<16x64xf32>, vector<16x64xf32> -> vector<16x64xf32>
    %12 = tpu.concatenate %9, %11 in 0 : vector<16x64xf32>, vector<16x64xf32> -> vector<32x64xf32>
    %cst_10 = arith.constant 0.000000e+00 : f32
    %13 = vector.broadcast %cst_10 : f32 to vector<32x64xf32>
    %14 = arith.cmpf ogt, %12, %13 : vector<32x64xf32>
    %cst_11 = arith.constant 2.000000e-01 : f32
    %15 = vector.broadcast %cst_11 : f32 to vector<32x64xf32>
    %16 = arith.mulf %15, %12 : vector<32x64xf32>
    %17 = arith.select %14, %12, %16 : vector<32x64xi1>, vector<32x64xf32>
    %c0_12 = arith.constant 0 : index
    %c0_13 = arith.constant 0 : index
    %18 = vector.load %arg5[%c0_12, %c0_13] : memref<64x16xf32, #tpu.memory_space<vmem>>, vector<64x16xf32>
    %c0_14 = arith.constant 0 : index
    %c0_15 = arith.constant 0 : index
    %19 = vector.load %arg6[%c0_14, %c0_15] : memref<1x16xf32, #tpu.memory_space<vmem>>, vector<1x16xf32>
    %cst_16 = arith.constant dense<0.000000e+00> : vector<32x16xf32>
    %20 = tpu.matmul %17, %18, %cst_16 {dimension_numbers = #tpu.dot_dimension_numbers<[1], [0], [0], [1], [0, 0, 1, 1], [], []>} : vector<32x64xf32>, vector<64x16xf32>, vector<32x16xf32> -> vector<32x16xf32>
    %21 = vector.broadcast %19 : vector<1x16xf32> to vector<32x16xf32>
    %22 = arith.addf %20, %21 : vector<32x16xf32>
    %23 = vector.extract_strided_slice %22 {offsets = [0, 0], sizes = [16, 16], strides = [1, 1]} : vector<32x16xf32> to vector<16x16xf32>
    %cst_17 = arith.constant dense<0.000000e+00> : vector<16x16xf32>
    %24 = tpu.matmul %0, %23, %cst_17 {dimension_numbers = #tpu.dot_dimension_numbers<[1], [0], [0], [1], [0, 0, 1, 1], [], []>} : vector<16x16xf32>, vector<16x16xf32>, vector<16x16xf32> -> vector<16x16xf32>
    %25 = vector.extract_strided_slice %22 {offsets = [16, 0], sizes = [16, 16], strides = [1, 1]} : vector<32x16xf32> to vector<16x16xf32>
    %cst_18 = arith.constant dense<0.000000e+00> : vector<16x16xf32>
    %26 = tpu.matmul %0, %25, %cst_18 {dimension_numbers = #tpu.dot_dimension_numbers<[1], [0], [0], [1], [0, 0, 1, 1], [], []>} : vector<16x16xf32>, vector<16x16xf32>, vector<16x16xf32> -> vector<16x16xf32>
    %27 = tpu.concatenate %24, %26 in 0 : vector<16x16xf32>, vector<16x16xf32> -> vector<32x16xf32>
    %28 = vector.shape_cast %27 : vector<32x16xf32> to vector<2x16x16xf32>
    %c0_19 = arith.constant 0 : index
    %c0_20 = arith.constant 0 : index
    %c0_21 = arith.constant 0 : index
    %29 = vector.load %arg7[%c0_19, %c0_20, %c0_21] : memref<2x16x16xf32, #tpu.memory_space<vmem>>, vector<2x16x16xf32>
    tpu.vector_store %arg7[%c0_19, %c0_20, %c0_21], %28 {strides = array<i32>} : memref<2x16x16xf32, #tpu.memory_space<vmem>>, vector<2x16x16xf32>,
    return
  }
  func.func @transform_0(%arg0: i32) -> (i32, i32, i32) {
    %c0_i32 = arith.constant 0 : i32
    %c0_i32_0 = arith.constant 0 : i32
    %c0_i32_1 = arith.constant 0 : i32
    return %arg0, %c0_i32, %c0_i32_0 : i32, i32, i32
  }
  func.func @transform_1(%arg0: i32) -> (i32, i32) {
    %c0_i32 = arith.constant 0 : i32
    %c0_i32_0 = arith.constant 0 : i32
    %c0_i32_1 = arith.constant 0 : i32
    return %c0_i32, %c0_i32_0 : i32, i32
  }
  func.func @transform_2(%arg0: i32) -> (i32, i32) {
    %c0_i32 = arith.constant 0 : i32
    %c0_i32_0 = arith.constant 0 : i32
    %c0_i32_1 = arith.constant 0 : i32
    return %c0_i32, %c0_i32_0 : i32, i32
  }
  func.func @transform_3(%arg0: i32) -> (i32, i32) {
    %c0_i32 = arith.constant 0 : i32
    %c0_i32_0 = arith.constant 0 : i32
    %c0_i32_1 = arith.constant 0 : i32
    return %c0_i32, %c0_i32_0 : i32, i32
  }
  func.func @transform_4(%arg0: i32) -> (i32, i32) {
    %c0_i32 = arith.constant 0 : i32
    %c0_i32_0 = arith.constant 0 : i32
    %c0_i32_1 = arith.constant 0 : i32
    return %c0_i32, %c0_i32_0 : i32, i32
  }
  func.func @transform_5(%arg0: i32) -> (i32, i32) {
    %c0_i32 = arith.constant 0 : i32
    %c0_i32_0 = arith.constant 0 : i32
    %c0_i32_1 = arith.constant 0 : i32
    return %c0_i32, %c0_i32_0 : i32, i32
  }
  func.func @transform_6(%arg0: i32) -> (i32, i32, i32) {
    %c0_i32 = arith.constant 0 : i32
    %c0_i32_0 = arith.constant 0 : i32
    %c0_i32_1 = arith.constant 0 : i32
    return %arg0, %c0_i32, %c0_i32_0 : i32, i32, i32
  }
}

</mosaic_0001>

<llo_original>
// kernel: tpu_custom_call.1
$region0: #{tpu_custom_call.1}
  #allocation0 [shape = 'u32[]', space=smem, size = 0x4, offset = 0x4, fixed_abs, tag = 'smem constant byte address 0x4 - core index']
  #allocation1 [shape = 'u32[72,128]{1,0:T(1,128)}', space=vmem, size = 0x9000, scoped, tag = 'internal scratch']
  %s0 = inlined_call_operand.vmem [shape: f32[2,16,32], index: 0, kind: input, shape index: {}]
  %s1 = inlined_call_operand.vmem [shape: f32[16,16], index: 1, kind: input, shape index: {}]
  %s2 = inlined_call_operand.vmem [shape: f32[32,64], index: 2, kind: input, shape index: {}]
  %s3 = inlined_call_operand.vmem [shape: f32[1,64], index: 3, kind: input, shape index: {}]
  %s4 = inlined_call_operand.vmem [shape: f32[64,16], index: 4, kind: input, shape index: {}]
  %s5 = inlined_call_operand.vmem [shape: f32[1,16], index: 5, kind: input, shape index: {}]
  %s6 = inlined_call_operand.hbm [shape: f32[2,16,16], index: 6, kind: output, shape index: {}]
  %s7 = sld [smem:[#allocation0]]
  $region34: #{tpu_custom_call.1} parent=0
    _
  %s9 = ssub.s32 1, %s7
  %s10 = scalar_select 0, %s9, %s7
  $region1: #{tpu_custom_call.1} parent=0
    #allocation2 [shape = 'u8[16384]{0}', space=vmem, size = 0x4000, scoped, tag = 'output window, operand 0, single buffered']
    #allocation3 [shape = 's32[1]{0}', space=sflag, size = 0x4, scoped, tag = 'scoped memory for tpu_custom_call.1']
    %11 = vsyncpa [#allocation3], 0
    // Predicated region
    $region2: #{tpu_custom_call.1} parent=1 // pred_check
      _
    $region3: #{tpu_custom_call.1} parent=1 // pred_check_branch
      %13 = sbr.rel (0) target = $region5
    $region4: #{tpu_custom_call.1} parent=1 // pred_region
      _
    $region5: #{tpu_custom_call.1} parent=1 // pred_fallthru
      _
    // Predicated region
    $region6: #{tpu_custom_call.1} parent=1 // pred_check
      _
    $region7: #{tpu_custom_call.1} parent=1 // pred_check_branch
      %15 = sbr.rel (0) target = $region9
    $region8: #{tpu_custom_call.1} parent=1 // pred_region
      _
    $region9: #{tpu_custom_call.1} parent=1 // pred_fallthru
      _
    // Predicated region
    $region10: #{tpu_custom_call.1} parent=1 // pred_check
      _
    $region11: #{tpu_custom_call.1} parent=1 // pred_check_branch
      %17 = sbr.rel (0) target = $region13
    $region12: #{tpu_custom_call.1} parent=1 // pred_region
      _
    $region13: #{tpu_custom_call.1} parent=1 // pred_fallthru
      _
    // Predicated region
    $region14: #{tpu_custom_call.1} parent=1 // pred_check
      _
    $region15: #{tpu_custom_call.1} parent=1 // pred_check_branch
      %19 = sbr.rel (0) target = $region17
    $region16: #{tpu_custom_call.1} parent=1 // pred_region
      _
    $region17: #{tpu_custom_call.1} parent=1 // pred_fallthru
      _
    // Predicated region
    $region18: #{tpu_custom_call.1} parent=1 // pred_check
      _
    $region19: #{tpu_custom_call.1} parent=1 // pred_check_branch
      %21 = sbr.rel (0) target = $region21
    $region20: #{tpu_custom_call.1} parent=1 // pred_region
      _
    $region21: #{tpu_custom_call.1} parent=1 // pred_fallthru
      _
    // Predicated region
    $region22: #{tpu_custom_call.1} parent=1 // pred_check
      _
    $region23: #{tpu_custom_call.1} parent=1 // pred_check_branch
      %23 = sbr.rel (0) target = $region25
    $region24: #{tpu_custom_call.1} parent=1 // pred_region
      _
    $region25: #{tpu_custom_call.1} parent=1 // pred_fallthru
      _
    %v24 = vld [vmem:[%s1] sm:$0xff]
    %v25 = vld [vmem:[%s1 + $0x8] sm:$0xff]
    %v26 = vld [vmem:[%s0] sm:$0xff]
    %v27 = vld [vmem:[%s0 + $0x8] sm:$0xff]
    %v28 = vld [vmem:[%s0 + $0x10] sm:$0xff]
    %v29 = vld [vmem:[%s0 + $0x18] sm:$0xff]
    %v30 = vld [vmem:[%s2] sm:$0xff]
    %v31 = vld [vmem:[%s2 + $0x8] sm:$0xff]
    %v32 = vld [vmem:[%s2 + $0x10] sm:$0xff]
    %v33 = vld [vmem:[%s2 + $0x18] sm:$0xff]
    %v34 = vld [vmem:[%s3] sm:$0x1]
    %v36 = vperm.slane %v34, 0
    %vm38 = vcmask 261120
    %v40 = vsel %vm38, %v26, 0
    %v43 = vsel %vm38, %v27, 0
    %v46 = vsel %vm38, %v28, 0
    %v49 = vsel %vm38, %v29, 0
    %51 = vmatpush.msra.mxu0 0.0
    %52 = vmatpush.msra.mxu0 0.0
    %53 = vmatpush.msra.mxu0 0.0
    %54 = vmatpush.msra.mxu0 0.0
    %55 = vmatpush.msra.mxu0 0.0
    %56 = vmatpush.msra.mxu0 0.0
    %57 = vmatpush.msra.mxu0 0.0
    %58 = vmatpush.msra.mxu0 0.0
    %59 = vmatpush.msra.mxu0 0.0
    %60 = vmatpush.msra.mxu0 0.0
    %61 = vmatpush.msra.mxu0 0.0
    %62 = vmatpush.msra.mxu0 0.0
    %63 = vmatpush.msra.mxu0 %v33
    %64 = vmatpush.msra.mxu0 %v32
    %65 = vmatpush.msra.mxu0 %v31
    %66 = vmatpush.msra.mxu0 %v30
    %67 = vmatmul.f32.gmra.mxu0 %v40
    %v68 = vpop.f32.mrf.mxu0
    %v69 = vadd.f32 %v36, %v68
    %70 = vmatmul.f32.gmra.mxu0 %v43
    %v71 = vpop.f32.mrf.mxu0
    %v72 = vadd.f32 %v36, %v71
    %73 = vmatmul.f32.gmra.mxu0 %v46
    %v74 = vpop.f32.mrf.mxu0
    %v75 = vadd.f32 %v36, %v74
    %76 = vmatmul.f32.gmra.mxu0 %v49
    %v77 = vpop.f32.mrf.mxu0
    %v78 = vadd.f32 %v36, %v77
    %79 = vdwg.mxu0
    %vm80 = vcmask 130048
    %v82 = vsel %vm80, %v24, 0
    %v85 = vsel %vm80, %v25, 0
    %87 = vmatpush.msra.mxu0 0.0
    %88 = vmatpush.msra.mxu0 0.0
    %89 = vmatpush.msra.mxu0 0.0
    %90 = vmatpush.msra.mxu0 0.0
    %91 = vmatpush.msra.mxu0 0.0
    %92 = vmatpush.msra.mxu0 0.0
    %93 = vmatpush.msra.mxu0 0.0
    %94 = vmatpush.msra.mxu0 0.0
    %95 = vmatpush.msra.mxu0 0.0
    %96 = vmatpush.msra.mxu0 0.0
    %97 = vmatpush.msra.mxu0 0.0
    %98 = vmatpush.msra.mxu0 0.0
    %99 = vmatpush.msra.mxu0 0.0
    %100 = vmatpush.msra.mxu0 0.0
    %101 = vmatpush.msra.mxu0 %v72
    %102 = vmatpush.msra.mxu0 %v69
    %103 = vmatmul.f32.gmra.mxu0 %v82
    %v104 = vpop.f32.mrf.mxu0
    %v105 = vadd.f32 0.0, %v104
    %106 = vmatmul.f32.gmra.mxu0 %v85
    %v107 = vpop.f32.mrf.mxu0
    %v108 = vadd.f32 0.0, %v107
    %109 = vdwg.mxu0
    %110 = vmatpush.msra.mxu0 0.0
    %111 = vmatpush.msra.mxu0 0.0
    %112 = vmatpush.msra.mxu0 0.0
    %113 = vmatpush.msra.mxu0 0.0
    %114 = vmatpush.msra.mxu0 0.0
    %115 = vmatpush.msra.mxu0 0.0
    %116 = vmatpush.msra.mxu0 0.0
    %117 = vmatpush.msra.mxu0 0.0
    %118 = vmatpush.msra.mxu0 0.0
    %119 = vmatpush.msra.mxu0 0.0
    %120 = vmatpush.msra.mxu0 0.0
    %121 = vmatpush.msra.mxu0 0.0
    %122 = vmatpush.msra.mxu0 0.0
    %123 = vmatpush.msra.mxu0 0.0
    %124 = vmatpush.msra.mxu0 %v78
    %125 = vmatpush.msra.mxu0 %v75
    %126 = vmatmul.f32.gmra.mxu0 %v82
    %v127 = vpop.f32.mrf.mxu0
    %v128 = vadd.f32 0.0, %v127
    %129 = vmatmul.f32.gmra.mxu0 %v85
    %v130 = vpop.f32.mrf.mxu0
    %v131 = vadd.f32 0.0, %v130
    %132 = vdwg.mxu0
    %vm133 = vcmp.gt.f32.partialorder %v105, 0.0
    %vm134 = vcmp.gt.f32.partialorder %v108, 0.0
    %vm135 = vcmp.gt.f32.partialorder %v128, 0.0
    %vm136 = vcmp.gt.f32.partialorder %v131, 0.0
    %v137 = vmul.f32 %v105, 0.2
    %v138 = vmul.f32 %v108, 0.2
    %v139 = vmul.f32 %v128, 0.2
    %v140 = vmul.f32 %v131, 0.2
    %v141 = vsel %vm133, %v105, %v137
    %v142 = vsel %vm134, %v108, %v138
    %v143 = vsel %vm135, %v128, %v139
    %v144 = vsel %vm136, %v131, %v140
    %v145 = vld [vmem:[%s4] sm:$0xff]
    %v146 = vld [vmem:[%s4 + $0x8] sm:$0xff]
    %v147 = vld [vmem:[%s4 + $0x10] sm:$0xff]
    %v148 = vld [vmem:[%s4 + $0x18] sm:$0xff]
    %v149 = vld [vmem:[%s4 + $0x20] sm:$0xff]
    %v150 = vld [vmem:[%s4 + $0x28] sm:$0xff]
    %v151 = vld [vmem:[%s4 + $0x30] sm:$0xff]
    %v152 = vld [vmem:[%s4 + $0x38] sm:$0xff]
    %v153 = vld [vmem:[%s5] sm:$0x1]
    %v155 = vperm.slane %v153, 0
    %vm157 = vcmask 523264
    %v159 = vsel %vm157, %v141, 0
    %v162 = vsel %vm157, %v142, 0
    %v165 = vsel %vm157, %v143, 0
    %v168 = vsel %vm157, %v144, 0
    %170 = vmatpush.msra.mxu0 0.0
    %171 = vmatpush.msra.mxu0 0.0
    %172 = vmatpush.msra.mxu0 0.0
    %173 = vmatpush.msra.mxu0 0.0
    %174 = vmatpush.msra.mxu0 0.0
    %175 = vmatpush.msra.mxu0 0.0
    %176 = vmatpush.msra.mxu0 0.0
    %177 = vmatpush.msra.mxu0 0.0
    %178 = vmatpush.msra.mxu0 %v152
    %179 = vmatpush.msra.mxu0 %v151
    %180 = vmatpush.msra.mxu0 %v150
    %181 = vmatpush.msra.mxu0 %v149
    %182 = vmatpush.msra.mxu0 %v148
    %183 = vmatpush.msra.mxu0 %v147
    %184 = vmatpush.msra.mxu0 %v146
    %185 = vmatpush.msra.mxu0 %v145
    %186 = vmatmul.f32.gmra.mxu0 %v159
    %v187 = vpop.f32.mrf.mxu0
    %v188 = vadd.f32 %v155, %v187
    %189 = vmatmul.f32.gmra.mxu0 %v162
    %v190 = vpop.f32.mrf.mxu0
    %v191 = vadd.f32 %v155, %v190
    %192 = vmatmul.f32.gmra.mxu0 %v165
    %v193 = vpop.f32.mrf.mxu0
    %v194 = vadd.f32 %v155, %v193
    %195 = vmatmul.f32.gmra.mxu0 %v168
    %v196 = vpop.f32.mrf.mxu0
    %v197 = vadd.f32 %v155, %v196
    %198 = vdwg.mxu0
    %199 = vmatpush.msra.mxu0 0.0
    %200 = vmatpush.msra.mxu0 0.0
    %201 = vmatpush.msra.mxu0 0.0
    %202 = vmatpush.msra.mxu0 0.0
    %203 = vmatpush.msra.mxu0 0.0
    %204 = vmatpush.msra.mxu0 0.0
    %205 = vmatpush.msra.mxu0 0.0
    %206 = vmatpush.msra.mxu0 0.0
    %207 = vmatpush.msra.mxu0 0.0
    %208 = vmatpush.msra.mxu0 0.0
    %209 = vmatpush.msra.mxu0 0.0
    %210 = vmatpush.msra.mxu0 0.0
    %211 = vmatpush.msra.mxu0 0.0
    %212 = vmatpush.msra.mxu0 0.0
    %213 = vmatpush.msra.mxu0 %v191
    %214 = vmatpush.msra.mxu0 %v188
    %215 = vmatmul.f32.gmra.mxu0 %v82
    %v216 = vpop.f32.mrf.mxu0
    %v217 = vadd.f32 0.0, %v216
    %218 = vmatmul.f32.gmra.mxu0 %v85
    %v219 = vpop.f32.mrf.mxu0
    %v220 = vadd.f32 0.0, %v219
    %221 = vdwg.mxu0
    %222 = vmatpush.msra.mxu0 0.0
    %223 = vmatpush.msra.mxu0 0.0
    %224 = vmatpush.msra.mxu0 0.0
    %225 = vmatpush.msra.mxu0 0.0
    %226 = vmatpush.msra.mxu0 0.0
    %227 = vmatpush.msra.mxu0 0.0
    %228 = vmatpush.msra.mxu0 0.0
    %229 = vmatpush.msra.mxu0 0.0
    %230 = vmatpush.msra.mxu0 0.0
    %231 = vmatpush.msra.mxu0 0.0
    %232 = vmatpush.msra.mxu0 0.0
    %233 = vmatpush.msra.mxu0 0.0
    %234 = vmatpush.msra.mxu0 0.0
    %235 = vmatpush.msra.mxu0 0.0
    %236 = vmatpush.msra.mxu0 %v197
    %237 = vmatpush.msra.mxu0 %v194
    %238 = vmatmul.f32.gmra.mxu0 %v82
    %v239 = vpop.f32.mrf.mxu0
    %v240 = vadd.f32 0.0, %v239
    %241 = vmatmul.f32.gmra.mxu0 %v85
    %v242 = vpop.f32.mrf.mxu0
    %v243 = vadd.f32 0.0, %v242
    %244 = vdwg.mxu0
    %245 = vst.msk [vmem:[#allocation2] sm:$0xff] %vm80, %v217
    %246 = vst.msk [vmem:[#allocation2 + $0x8] sm:$0xff] %vm80, %v220
    %247 = vst.msk [vmem:[#allocation2 + $0x10] sm:$0xff] %vm80, %v240
    %248 = vst.msk [vmem:[#allocation2 + $0x18] sm:$0xff] %vm80, %v243
    // Predicated region
    $region26: #{tpu_custom_call.1} parent=1 // pred_check
      _
    $region27: #{tpu_custom_call.1} parent=1 // pred_check_branch
      %250 = sbr.rel (0) target = $region29
    $region28: #{tpu_custom_call.1} parent=1 // pred_region
      %252 = vsyncadd [#allocation3], 0
      %s253 = sshll.u32 [#allocation2], 4
      %s254 = int_to_ptr.vmem [resolvable:$true] %s253
      %s255 = sshll.u32 %s6, 4
      %s256 = int_to_ptr.hbm [resolvable:$true] %s255
      %261 = dma.vmem_to_hbm [thread:$0]  %s254, 512, %s256, [#allocation3], 128, 128, 8
    $region29: #{tpu_custom_call.1} parent=1 // pred_fallthru
      _
    // Predicated region
    $region30: #{tpu_custom_call.1} parent=1 // pred_check
      _
    $region31: #{tpu_custom_call.1} parent=1 // pred_check_branch
      %263 = sbr.rel (0) target = $region33
    $region32: #{tpu_custom_call.1} parent=1 // pred_region
      %265 = dma.done [#allocation3], 512
    $region33: #{tpu_custom_call.1} parent=1 // pred_fallthru
      _
    %266 = vsyncpa [#allocation3], 1

</llo_original>
